<compile_context>
chip_gen: v7x
topology: tpu7x:2x2x1
jax: 0.10.0
libtpu: 0.0.40
codegen_flags: <defaults>
</compile_context>

<pallas_src>
import functools

import jax
import jax.numpy as jnp
import numpy as np
from jax import lax
from jax.experimental import pallas as pl
from jax.experimental.pallas import tpu as pltpu


def ma_loss_kernel(cls_ref, onehot_ref, gtsum_ref, mask_ref, gt_ref, out_ref,
                   acc_ref, *, num_gt, true_hw, tile_hw, mask_tail):
    # cls_ref    : (1, Q, Cm1)    class logits ("void" class already dropped)
    # onehot_ref : (1, K, Cm1)    one-hot of gt labels (f32)
    # gtsum_ref  : (1, K, 1)      per-gt-mask areas, precomputed in wrapper
    # mask_ref   : (1, Q, thw)    raw mask-proposal logits (narrow HBM dtype ok)
    # gt_ref     : (1, Kp, thw)   gt masks (bf16); row K is all-ones -> pred_sum,
    #                             rows K+1..Kp-1 are zero padding (sublane align)
    # out_ref    : (1, 1, 128)    per-batch scalar, broadcast across 128 lanes
    # acc_ref    : (Kp, Q) f32    accumulates [iand ; pred_sum ; 0...] over HW tiles
    hw = pl.program_id(1)

    @pl.when(hw == 0)
    def _init():
        acc_ref[...] = jnp.zeros_like(acc_ref)

    # ---- per-HW-tile accumulation (hot loop) --------------------------------
    x = mask_ref[0].astype(jnp.float32)                             # (Q, thw)
    # sigmoid via tanh: a single EUP op per element instead of exp + divide.
    pred = 0.5 * jnp.tanh(0.5 * x) + 0.5                            # f32
    gt = gt_ref[0]                                                  # (Kp, thw) bf16

    if mask_tail:
        # Ragged tail of the last HW tile: zero out-of-range columns in-kernel
        # (cheaper than re-materializing a padded copy of the mask tensor in HBM).
        col = lax.broadcasted_iota(jnp.int32, (1, tile_hw), 1)
        valid = (hw * tile_hw + col) < true_hw                      # (1, thw)
        pred = jnp.where(valid, pred, 0.0)
        gt = jnp.where(valid, gt, jnp.zeros_like(gt))

    # Single-pass bf16 MXU matmul with f32 accumulation.  The all-ones gt row
    # makes pred_sum fall out of the same call (no big cross-lane reduce).
    acc_ref[...] += lax.dot_general(
        gt, pred.astype(jnp.bfloat16), (((1,), (1,)), ((), ())),
        preferred_element_type=jnp.float32)                         # (Kp, Q)

    # ---- finalize: softmax gather, IoU, SmoothL1 -----------------------------
    @pl.when(hw == pl.num_programs(1) - 1)
    def _finalize():
        K = num_gt
        cls = cls_ref[0].astype(jnp.float32)                        # (Q, Cm1)
        m = jnp.max(cls, axis=-1, keepdims=True)
        e = jnp.exp(cls - m)                                        # unnormalized softmax
        denom = jnp.sum(e, axis=-1)[None, :]                        # (1, Q)

        onehot = onehot_ref[0]                                      # (K, Cm1)
        # gathered numerator: e_sel[k, q] = e[q, labels[k]]  (tiny matmul, keep f32)
        e_sel = lax.dot_general(
            onehot, e, (((1,), (1,)), ((), ())),
            preferred_element_type=jnp.float32,
            precision=lax.Precision.HIGHEST)                        # (K, Q)
        logit_sel = e_sel * (1.0 / denom)                           # normalize after gather

        acc = acc_ref[...]                                          # (Kp, Q)
        iand = acc[:K, :]                                           # (K, Q)
        pred_sum = acc[K:K + 1, :]                                  # (1, Q)
        gt_sum = gtsum_ref[0]                                       # (K, 1)
        iou = iand / (gt_sum + pred_sum - iand + 1e-7)              # (K, Q)

        # SmoothL1 (beta = 1.0, nn.SmoothL1Loss default)
        d = logit_sel - iou
        ad = jnp.abs(d)
        sl1 = jnp.where(ad < 1.0, 0.5 * d * d, ad - 0.5)            # (K, Q)

        per_q = jnp.sum(sl1, axis=0, keepdims=True)                 # (1, Q)  sublane reduce
        total = jnp.sum(per_q, axis=1, keepdims=True)               # (1, 1)  lane reduce
        out_ref[0] = jnp.broadcast_to(total, out_ref.shape[1:])     # lane-dense store


def ma_loss_pallas(cls_results, mask_results, gt_masks, gt_labels, *,
                   hw_tile_cap=8192):
    bs, Q, C = cls_results.shape
    K = gt_masks.shape[1]
    H, W = mask_results.shape[-2:]
    gH, gW = gt_masks.shape[-2:]
    # TODO(synk): bilinear resize branch of get_iou not implemented.
    assert (H, W) == (gH, gW), "pred / GT resolutions must match"
    assert hw_tile_cap >= 128
    HW = H * W
    Cm1 = C - 1
    # NOTE: gt_labels must be < C-1 ("void" class is dropped); a label equal to
    # C-1 would be out-of-bounds in the PyTorch reference as well.

    # Small arrays: drop the "void" class, build one-hot gather matrix (f32).
    cls_in = cls_results[..., :Cm1].astype(jnp.float32)              # (bs, Q, Cm1)
    onehot = jax.nn.one_hot(gt_labels, Cm1, dtype=jnp.float32)       # (bs, K, Cm1)

    # Big arrays: keep caller's (narrow) dtype in HBM; kernel upcasts on-chip.
    mask_flat = mask_results.reshape(bs, Q, HW)
    gt_f32 = gt_masks.reshape(bs, K, HW).astype(jnp.float32)
    # gt_sum is independent of pred -> hoist the exact reduce to the wrapper.
    gt_sum = jnp.sum(gt_f32, axis=-1, keepdims=True)                 # (bs, K, 1)

    # gt masks are exactly {0,1} -> bf16 storage is lossless, halves DMA bytes.
    # Append an all-ones row (gives pred_sum from the same matmul) and zero-pad
    # rows up to the bf16 sublane multiple (16) for full-tile DMA / MXU LHS.
    Kp = ((K + 1 + 15) // 16) * 16
    gt_ext = jnp.concatenate(
        [gt_f32.astype(jnp.bfloat16),
         jnp.ones((bs, 1, HW), jnp.bfloat16),
         jnp.zeros((bs, Kp - (K + 1), HW), jnp.bfloat16)], axis=1)   # (bs, Kp, HW)

    # HW tiling: prefer a 128-multiple divisor of HW (no wrapper-side padding of
    # the largest tensor). If no usable divisor exists, use a ragged last tile
    # masked in-kernel.
    if HW <= hw_tile_cap:
        tile_hw = HW
        mask_tail = False
    else:
        cap = (hw_tile_cap // 128) * 128
        tile_hw = 0
        for t in range(cap, 0, -128):
            if HW % t == 0:
                tile_hw = t
                break
        if tile_hw < 1024:          # HW has no decent 128-multiple divisor
            tile_hw = cap
        mask_tail = (HW % tile_hw != 0)
    n_hw = pl.cdiv(HW, tile_hw)

    # VMEM budget: double-buffered mask + gt blocks, the f32/bf16 pred
    # intermediate, and the small resident blocks / accumulator.  Capped well
    # under v7x's 64 MiB physical VMEM.  For very large Q, lower hw_tile_cap.
    mask_blk = Q * tile_hw * mask_flat.dtype.itemsize
    gt_blk = Kp * tile_hw * 2
    pred_tmp = Q * tile_hw * (4 + 2)
    small = (Q * Cm1 + K * Cm1 + K + Kp * Q + 128) * 4
    est = 2 * (mask_blk + gt_blk) + pred_tmp + 2 * small
    vmem_limit = int(min(max(2 * est, 32 * 2**20), 56 * 2**20))

    cost = pl.CostEstimate(
        flops=int(2 * bs * Kp * Q * HW + 2 * bs * K * Q * Cm1),
        transcendentals=int(bs * Q * HW + bs * Q * Cm1),
        bytes_accessed=int(mask_flat.size * mask_flat.dtype.itemsize
                           + gt_ext.size * 2 + cls_in.size * 4
                           + onehot.size * 4 + gt_sum.size * 4 + bs * 128 * 4),
    )

    kernel = functools.partial(ma_loss_kernel, num_gt=K, true_hw=HW,
                               tile_hw=tile_hw, mask_tail=mask_tail)
    out = pl.pallas_call(
        kernel,
        out_shape=jax.ShapeDtypeStruct((bs, 1, 128), jnp.float32),
        grid_spec=pltpu.PrefetchScalarGridSpec(
            num_scalar_prefetch=0,
            grid=(bs, n_hw),
            in_specs=[
                pl.BlockSpec((1, Q, Cm1), lambda b, hw: (b, 0, 0)),
                pl.BlockSpec((1, K, Cm1), lambda b, hw: (b, 0, 0)),
                pl.BlockSpec((1, K, 1), lambda b, hw: (b, 0, 0)),
                pl.BlockSpec((1, Q, tile_hw), lambda b, hw: (b, 0, hw)),
                pl.BlockSpec((1, Kp, tile_hw), lambda b, hw: (b, 0, hw)),
            ],
            out_specs=pl.BlockSpec((1, 1, 128), lambda b, hw: (b, 0, 0)),
            scratch_shapes=[
                pltpu.VMEM((Kp, Q), jnp.float32),   # [iand ; pred_sum ; pad] accumulator
            ],
        ),
        compiler_params=pltpu.CompilerParams(
            dimension_semantics=("parallel", "arbitrary"),
            vmem_limit_bytes=vmem_limit),
        cost_estimate=cost,
    )(cls_in, onehot, gt_sum, mask_flat, gt_ext)

    # Each (b, k) torch-loop term is a mean over Q queries; overall mean over bs*K terms.
    return jnp.sum(out[:, 0, 0]) / (Q * bs * K)


def ma_loss_ref(cls_results, mask_results, gt_masks, gt_labels):
    """Pure-JAX reference mirroring the PyTorch module loop (f32 compute)."""
    bs, Q, _ = cls_results.shape
    probs = jax.nn.softmax(cls_results[..., :-1].astype(jnp.float32), axis=-1)
    pred = jax.nn.sigmoid(mask_results.astype(jnp.float32)).reshape(bs, Q, -1)
    gt = gt_masks.astype(jnp.float32)
    total = 0.0
    count = 0
    for b in range(bs):
        for i in range(gt.shape[1]):
            logiti = probs[b, :, gt_labels[b, i]]                # (Q,)
            t = gt[b, i].reshape(-1)                             # (HW,)
            iand = jnp.sum(t[None, :] * pred[b], axis=-1)        # (Q,)
            ior = jnp.sum(t) + jnp.sum(pred[b], axis=-1) - iand + 1e-7
            iou = iand / ior
            d = logiti - iou
            ad = jnp.abs(d)
            sl1 = jnp.where(ad < 1.0, 0.5 * d * d, ad - 0.5)
            total = total + jnp.mean(sl1)
            count += 1
    return total / count


if __name__ == "__main__":
    # small shapes consistent with the module:
    #   bs=2, Q(=num queries)=16, C(=num classes incl. void)=129, H=W=16, K(=gt masks)=3
    bs, Q, C, H, W, K = 2, 16, 129, 16, 16, 3

    key = jax.random.PRNGKey(0)
    k1, k2, k3, k4 = jax.random.split(key, 4)
    cls_results = jax.random.normal(k1, (bs, Q, C), dtype=jnp.float32)
    # keep the big mask-proposal tensor in bf16 in HBM (kernel upcasts on-chip)
    mask_results = jax.random.normal(
        k2, (bs, Q, H, W), dtype=jnp.float32).astype(jnp.bfloat16)
    gt_masks = (jax.random.uniform(k3, (bs, K, H, W)) > 0.5).astype(jnp.float32)
    gt_labels = jax.random.randint(k4, (bs, K), 0, C - 1)  # never the dropped "void" class

    ma = jax.block_until_ready(
        ma_loss_pallas(cls_results, mask_results, gt_masks, gt_labels))
    ref = ma_loss_ref(cls_results, mask_results, gt_masks, gt_labels)
    # bf16 MXU operands for the IoU matmul -> compare against the pure-f32
    # reference with a correspondingly looser (but still tight) tolerance.
    assert np.allclose(np.asarray(ma), np.asarray(ref), rtol=1e-2, atol=1e-3), (ma, ref)

    print("KERNEL_OK")
</pallas_src>

<mosaic_0001>
module attributes {stable_mosaic.version = 11 : i64} {
  func.func @ma_loss_kernel(%arg0: i32, %arg1: i32, %arg2: memref<1x16x128xf32, #tpu.memory_space<vmem>>, %arg3: memref<1x3x128xf32, #tpu.memory_space<vmem>>, %arg4: memref<1x3x1xf32, #tpu.memory_space<vmem>>, %arg5: memref<1x16x256xbf16, #tpu.memory_space<vmem>>, %arg6: memref<1x16x256xbf16, #tpu.memory_space<vmem>>, %arg7: memref<1x1x128xf32, #tpu.memory_space<vmem>>, %arg8: memref<16x16xf32, #tpu.memory_space<vmem>>) attributes {dimension_semantics = [#tpu.dimension_semantics<parallel>, #tpu.dimension_semantics<arbitrary>], iteration_bounds = array<i64: 2, 1>, scalar_prefetch = 0 : i64, scratch_operands = 1 : i64, tpu.core_type = #tpu.core_type<tc>, window_params = [{transform_indices = @transform_0, window_bounds = array<i64: 1, 16, 128>}, {transform_indices = @transform_1, window_bounds = array<i64: 1, 3, 128>}, {transform_indices = @transform_2, window_bounds = array<i64: 1, 3, 1>}, {transform_indices = @transform_3, window_bounds = array<i64: 1, 16, 256>}, {transform_indices = @transform_4, window_bounds = array<i64: 1, 16, 256>}, {transform_indices = @transform_5, window_bounds = array<i64: 1, 1, 128>}]} {
    %c0_i32 = arith.constant 0 : i32
    %0 = arith.cmpi eq, %arg1, %c0_i32 : i32
    %1 = arith.extui %0 : i1 to i32
    %c0_i32_0 = arith.constant 0 : i32
    %2 = arith.cmpi ne, %1, %c0_i32_0 : i32
    scf.if %2 {
      %cst_15 = arith.constant 0.000000e+00 : f32
      %23 = vector.broadcast %cst_15 : f32 to vector<16x16xf32>
      %c0_16 = arith.constant 0 : index
      %c0_17 = arith.constant 0 : index
      %24 = vector.load %arg8[%c0_16, %c0_17] : memref<16x16xf32, #tpu.memory_space<vmem>>, vector<16x16xf32>
      tpu.vector_store %arg8[%c0_16, %c0_17], %23 {strides = array<i32>} : memref<16x16xf32, #tpu.memory_space<vmem>>, vector<16x16xf32>,
    } else {
    }
    %c0 = arith.constant 0 : index
    %c0_1 = arith.constant 0 : index
    %c0_2 = arith.constant 0 : index
    %3 = vector.load %arg5[%c0, %c0_1, %c0_2] : memref<1x16x256xbf16, #tpu.memory_space<vmem>>, vector<1x16x256xbf16>
    %4 = vector.shape_cast %3 : vector<1x16x256xbf16> to vector<16x256xbf16>
    %5 = arith.extf %4 : vector<16x256xbf16> to vector<16x256xf32>
    %cst = arith.constant 5.000000e-01 : f32
    %6 = vector.broadcast %cst : f32 to vector<16x256xf32>
    %7 = arith.mulf %6, %5 : vector<16x256xf32>
    %8 = math.tanh %7 : vector<16x256xf32>
    %cst_3 = arith.constant 5.000000e-01 : f32
    %9 = vector.broadcast %cst_3 : f32 to vector<16x256xf32>
    %10 = arith.mulf %9, %8 : vector<16x256xf32>
    %cst_4 = arith.constant 5.000000e-01 : f32
    %11 = vector.broadcast %cst_4 : f32 to vector<16x256xf32>
    %12 = arith.addf %10, %11 : vector<16x256xf32>
    %c0_5 = arith.constant 0 : index
    %c0_6 = arith.constant 0 : index
    %c0_7 = arith.constant 0 : index
    %13 = vector.load %arg6[%c0_5, %c0_6, %c0_7] : memref<1x16x256xbf16, #tpu.memory_space<vmem>>, vector<1x16x256xbf16>
    %14 = vector.shape_cast %13 : vector<1x16x256xbf16> to vector<16x256xbf16>
    %c0_8 = arith.constant 0 : index
    %c0_9 = arith.constant 0 : index
    %15 = vector.load %arg8[%c0_8, %c0_9] : memref<16x16xf32, #tpu.memory_space<vmem>>, vector<16x16xf32>
    %16 = arith.truncf %12 : vector<16x256xf32> to vector<16x256xbf16>
    %cst_10 = arith.constant dense<0.000000e+00> : vector<16x16xf32>
    %17 = tpu.matmul %14, %16, %cst_10 {dimension_numbers = #tpu.dot_dimension_numbers<[1], [1], [0], [0], [0, 0, 1, 0], [], []>} : vector<16x256xbf16>, vector<16x256xbf16>, vector<16x16xf32> -> vector<16x16xf32>
    %18 = arith.addf %15, %17 : vector<16x16xf32>
    %c0_11 = arith.constant 0 : index
    %c0_12 = arith.constant 0 : index
    %19 = vector.load %arg8[%c0_11, %c0_12] : memref<16x16xf32, #tpu.memory_space<vmem>>, vector<16x16xf32>
    tpu.vector_store %arg8[%c0_11, %c0_12], %18 {strides = array<i32>} : memref<16x16xf32, #tpu.memory_space<vmem>>, vector<16x16xf32>,
    %c0_i32_13 = arith.constant 0 : i32
    %20 = arith.cmpi eq, %arg1, %c0_i32_13 : i32
    %21 = arith.extui %20 : i1 to i32
    %c0_i32_14 = arith.constant 0 : i32
    %22 = arith.cmpi ne, %21, %c0_i32_14 : i32
    scf.if %22 {
      %c0_15 = arith.constant 0 : index
      %c0_16 = arith.constant 0 : index
      %c0_17 = arith.constant 0 : index
      %23 = vector.load %arg2[%c0_15, %c0_16, %c0_17] : memref<1x16x128xf32, #tpu.memory_space<vmem>>, vector<1x16x128xf32>
      %24 = vector.shape_cast %23 : vector<1x16x128xf32> to vector<16x128xf32>
      %cst_18 = arith.constant dense<0xFF800000> : vector<16xf32>
      %25 = vector.multi_reduction <maximumf>, %24, %cst_18 [1] : vector<16x128xf32> to vector<16xf32>
      %26 = vector.shape_cast %25 : vector<16xf32> to vector<16x1xf32>
      %27 = vector.broadcast %26 : vector<16x1xf32> to vector<16x128xf32>
      %28 = arith.subf %24, %27 : vector<16x128xf32>
      %29 = math.exp %28 : vector<16x128xf32>
      %cst_19 = arith.constant dense<0.000000e+00> : vector<16xf32>
      %30 = vector.multi_reduction <add>, %29, %cst_19 [1] : vector<16x128xf32> to vector<16xf32>
      %31 = vector.shape_cast %30 : vector<16xf32> to vector<1x16xf32>
      %c0_20 = arith.constant 0 : index
      %c0_21 = arith.constant 0 : index
      %c0_22 = arith.constant 0 : index
      %32 = vector.load %arg3[%c0_20, %c0_21, %c0_22] : memref<1x3x128xf32, #tpu.memory_space<vmem>>, vector<1x3x128xf32>
      %33 = vector.shape_cast %32 : vector<1x3x128xf32> to vector<3x128xf32>
      %cst_23 = arith.constant dense<0.000000e+00> : vector<3x16xf32>
      %34 = tpu.matmul %33, %29, %cst_23 {dimension_numbers = #tpu.dot_dimension_numbers<[1], [1], [0], [0], [0, 0, 1, 0], [], []>, precision = #tpu.contract_precision<fp32>} : vector<3x128xf32>, vector<16x128xf32>, vector<3x16xf32> -> vector<3x16xf32>
      %cst_24 = arith.constant 1.000000e+00 : f32
      %35 = vector.broadcast %cst_24 : f32 to vector<1x16xf32>
      %36 = arith.divf %35, %31 : vector<1x16xf32>
      %37 = vector.broadcast %36 : vector<1x16xf32> to vector<3x16xf32>
      %38 = arith.mulf %34, %37 : vector<3x16xf32>
      %c0_25 = arith.constant 0 : index
      %c0_26 = arith.constant 0 : index
      %39 = vector.load %arg8[%c0_25, %c0_26] : memref<16x16xf32, #tpu.memory_space<vmem>>, vector<16x16xf32>
      %40 = vector.extract_strided_slice %39 {offsets = [0, 0], sizes = [3, 16], strides = [1, 1]} : vector<16x16xf32> to vector<3x16xf32>
      %41 = vector.extract_strided_slice %39 {offsets = [3, 0], sizes = [1, 16], strides = [1, 1]} : vector<16x16xf32> to vector<1x16xf32>
      %c0_27 = arith.constant 0 : index
      %c0_28 = arith.constant 0 : index
      %c0_29 = arith.constant 0 : index
      %42 = vector.load %arg4[%c0_27, %c0_28, %c0_29] : memref<1x3x1xf32, #tpu.memory_space<vmem>>, vector<1x3x1xf32>
      %43 = vector.shape_cast %42 : vector<1x3x1xf32> to vector<3x1xf32>
      %44 = vector.broadcast %43 : vector<3x1xf32> to vector<3x16xf32>
      %45 = vector.broadcast %41 : vector<1x16xf32> to vector<3x16xf32>
      %46 = arith.addf %44, %45 : vector<3x16xf32>
      %47 = arith.subf %46, %40 : vector<3x16xf32>
      %cst_30 = arith.constant 1.000000e-07 : f32
      %48 = vector.broadcast %cst_30 : f32 to vector<3x16xf32>
      %49 = arith.addf %47, %48 : vector<3x16xf32>
      %50 = arith.divf %40, %49 : vector<3x16xf32>
      %51 = arith.subf %38, %50 : vector<3x16xf32>
      %52 = math.absf %51 : vector<3x16xf32>
      %cst_31 = arith.constant 1.000000e+00 : f32
      %53 = vector.broadcast %cst_31 : f32 to vector<3x16xf32>
      %54 = arith.cmpf olt, %52, %53 : vector<3x16xf32>
      %cst_32 = arith.constant 5.000000e-01 : f32
      %55 = vector.broadcast %cst_32 : f32 to vector<3x16xf32>
      %56 = arith.mulf %55, %51 : vector<3x16xf32>
      %57 = arith.mulf %56, %51 : vector<3x16xf32>
      %cst_33 = arith.constant 5.000000e-01 : f32
      %58 = vector.broadcast %cst_33 : f32 to vector<3x16xf32>
      %59 = arith.subf %52, %58 : vector<3x16xf32>
      %60 = arith.select %54, %57, %59 : vector<3x16xi1>, vector<3x16xf32>
      %cst_34 = arith.constant dense<0.000000e+00> : vector<16xf32>
      %61 = vector.multi_reduction <add>, %60, %cst_34 [0] : vector<3x16xf32> to vector<16xf32>
      %62 = vector.shape_cast %61 : vector<16xf32> to vector<1x16xf32>
      %cst_35 = arith.constant dense<0.000000e+00> : vector<1xf32>
      %63 = vector.multi_reduction <add>, %62, %cst_35 [1] : vector<1x16xf32> to vector<1xf32>
      %64 = vector.shape_cast %63 : vector<1xf32> to vector<1x1xf32>
      %65 = vector.shape_cast %64 : vector<1x1xf32> to vector<1x1xf32>
      %66 = vector.broadcast %65 : vector<1x1xf32> to vector<1x128xf32>
      %c0_36 = arith.constant 0 : index
      %c0_37 = arith.constant 0 : index
      %c0_38 = arith.constant 0 : index
      %67 = vector.load %arg7[%c0_36, %c0_37, %c0_38] : memref<1x1x128xf32, #tpu.memory_space<vmem>>, vector<1x1x128xf32>
      %68 = vector.shape_cast %67 : vector<1x1x128xf32> to vector<1x128xf32>
      %69 = vector.shape_cast %66 : vector<1x128xf32> to vector<1x1x128xf32>
      tpu.vector_store %arg7[%c0_36, %c0_37, %c0_38], %69 {strides = array<i32>} : memref<1x1x128xf32, #tpu.memory_space<vmem>>, vector<1x1x128xf32>,
    } else {
    }
    return
  }
  func.func @transform_0(%arg0: i32, %arg1: i32) -> (i32, i32, i32) {
    %c0_i32 = arith.constant 0 : i32
    %c0_i32_0 = arith.constant 0 : i32
    %c0_i32_1 = arith.constant 0 : i32
    return %arg0, %c0_i32, %c0_i32_0 : i32, i32, i32
  }
  func.func @transform_1(%arg0: i32, %arg1: i32) -> (i32, i32, i32) {
    %c0_i32 = arith.constant 0 : i32
    %c0_i32_0 = arith.constant 0 : i32
    %c0_i32_1 = arith.constant 0 : i32
    return %arg0, %c0_i32, %c0_i32_0 : i32, i32, i32
  }
  func.func @transform_2(%arg0: i32, %arg1: i32) -> (i32, i32, i32) {
    %c0_i32 = arith.constant 0 : i32
    %c0_i32_0 = arith.constant 0 : i32
    %c0_i32_1 = arith.constant 0 : i32
    return %arg0, %c0_i32, %c0_i32_0 : i32, i32, i32
  }
  func.func @transform_3(%arg0: i32, %arg1: i32) -> (i32, i32, i32) {
    %c0_i32 = arith.constant 0 : i32
    %c0_i32_0 = arith.constant 0 : i32
    return %arg0, %c0_i32, %arg1 : i32, i32, i32
  }
  func.func @transform_4(%arg0: i32, %arg1: i32) -> (i32, i32, i32) {
    %c0_i32 = arith.constant 0 : i32
    %c0_i32_0 = arith.constant 0 : i32
    return %arg0, %c0_i32, %arg1 : i32, i32, i32
  }
  func.func @transform_5(%arg0: i32, %arg1: i32) -> (i32, i32, i32) {
    %c0_i32 = arith.constant 0 : i32
    %c0_i32_0 = arith.constant 0 : i32
    %c0_i32_1 = arith.constant 0 : i32
    return %arg0, %c0_i32, %c0_i32_0 : i32, i32, i32
  }
}

</mosaic_0001>

<llo_original>
// kernel: tpu_custom_call.1
$region0: #{tpu_custom_call.1}
  #allocation0 [shape = 'u32[]', space=smem, size = 0x4, offset = 0x4, fixed_abs, tag = 'smem constant byte address 0x4 - core index']
  #allocation1 [shape = 'u32[144,128]{1,0:T(1,128)}', space=vmem, size = 0x12000, scoped, tag = 'internal scratch']
  #allocation2 [shape = 'f32[16,16]{1,0:T(8,128)}', space=vmem, size = 0x2000, scoped, tag = 'scratch operand']
  %s0 = inlined_call_operand.hbm [shape: f32[2,16,128], index: 0, kind: input, shape index: {}]
  %s1 = inlined_call_operand.vmem [shape: f32[2,3,128], index: 1, kind: input, shape index: {}]
  %s2 = inlined_call_operand.vmem [shape: f32[2,3,1], index: 2, kind: input, shape index: {}]
  %s3 = inlined_call_operand.vmem [shape: bf16[2,16,256], index: 3, kind: input, shape index: {}]
  %s4 = inlined_call_operand.hbm [shape: bf16[2,16,256], index: 4, kind: input, shape index: {}]
  %s5 = inlined_call_operand.hbm [shape: f32[2,1,128], index: 5, kind: output, shape index: {}]
  %s6 = sld [smem:[#allocation0]]
  $region69: #{tpu_custom_call.1} parent=0
    _
  %s8 = ssub.s32 1, %s6
  %s9 = scalar_select 0, %s8, %s6
  $region1: #{tpu_custom_call.1} parent=0
    #allocation3 [shape = 'u8[16384]{0}', space=vmem, size = 0x4000, scoped, tag = 'input window, operand 0']
    #allocation4 [shape = 's32[2]{0}', space=sflag, size = 0x8, scoped, tag = 'scoped memory for tpu_custom_call.1']
    #allocation5 [shape = 's32[2]{0}', space=sflag, size = 0x8, scoped, tag = 'scoped memory for tpu_custom_call.1']
    #allocation6 [shape = 'u8[16384]{0}', space=vmem, size = 0x4000, scoped, tag = 'input window, operand 4']
    #allocation7 [shape = 's32[2]{0}', space=sflag, size = 0x8, scoped, tag = 'scoped memory for tpu_custom_call.1']
    #allocation8 [shape = 'u8[1024]{0}', space=vmem, size = 0x400, scoped, tag = 'output window, operand 0']
    %10 = vsyncpa [#allocation4], 0
    %s11 = scalar_lea.sflag [#allocation4], 1
    %12 = vsyncpa %s11, 0
    %13 = vsyncpa [#allocation7], 0
    %s14 = scalar_lea.sflag [#allocation7], 1
    %15 = vsyncpa %s14, 0
    %16 = vsyncpa [#allocation5], 0
    %s17 = scalar_lea.sflag [#allocation5], 1
    %18 = vsyncpa %s17, 0
    loop: start=0, step=1, limit=4
    $region2: #{tpu_custom_call.1} parent=1 // loop_pre_header
      _
    $region3: #{tpu_custom_call.1} parent=1 // loop_header
      %s20 = sphi 0, %s24
      %p21 = scmp.ge.s32.totalorder %s20, 4
      %s27 = sphi 0, %s39
      %s28 = sphi 0, %s35
      %s29 = sphi 0, %s27
      %s30 = sphi 0, %s28
      %s31 = sphi 0, %s29
      %s32 = sphi 0, %s30
      %s42 = sphi 0, %s44
      %s45 = sphi 0, %s42
      %s46 = sphi 0, %s45
      %s62 = sphi 0, %s46
      %s68 = sphi 0, %s70
      %s71 = sphi 0, %s68
      %s72 = sphi 0, %s71
      %s88 = sphi 0, %s72
      %s94 = sphi 0, %s96
      %s97 = sphi 0, %s94
      %s98 = sphi 0, %s97
      %s114 = sphi 0, %s98
      %s122 = sphi 0, %s124
      %s125 = sphi 0, %s122
      %s126 = sphi 0, %s125
      %s142 = sphi 0, %s126
      %s150 = sphi 0, %s152
      %s153 = sphi 0, %s150
      %s154 = sphi 0, %s153
      %s170 = sphi 0, %s154
      %s176 = sphi 0, %s178
      %s179 = sphi 0, %s176
      %s180 = sphi 0, %s179
      %s196 = sphi 0, %s180
    $region4: #{tpu_custom_call.1} parent=1 // loop_header_branch
      %23 = sbr.rel (%p21) target = $region8
    $region5: #{tpu_custom_call.1} parent=1 // loop_body
      %s25 = ssub.s32 %s20, 1
      %s26 = ssub.s32 %s20, 2
      %s33 = sadd.s32 1, %s28
      %p34 = scmp.ge.s32.totalorder %s33, 1
      %s35 = scalar_select %p34, 0, %s33
      %s36 = sadd.s32 1, %s27
      %s37 = scalar_select %p34, %s36, %s27
      %p38 = scmp.ge.s32.totalorder %s37, 2
      %s39 = scalar_select %p38, 0, %s37
      %s40 = ssub.s32 %s27, %s39
      %p41 = scmp.eq.s32.totalorder %s40, 0
      %s43 = sadd.s32 %s42, 1
      %s44 = scalar_select %p41, %s42, %s43
      %p47 = pneg %p41
      %p48 = scmp.eq.s32.totalorder %s20, 1
      %p49 = por %p47, %p48
      %p50 = scmp.ne.s32.totalorder %s42, %s45
      %p51 = scmp.eq.s32.totalorder %s20, 0
      %p52 = por %p50, %p51
      %p53 = scmp.ne.s32.totalorder %s42, %s45
      %p54 = scmp.eq.s32.totalorder %s25, 1
      %p55 = por %p53, %p54
      %p56 = scmp.ne.s32.totalorder %s45, %s46
      %p57 = scmp.eq.s32.totalorder %s25, 0
      %p58 = por %p56, %p57
      %p59 = scmp.ne.s32.totalorder %s45, %s46
      %p60 = scmp.eq.s32.totalorder %s26, 1
      %p61 = por %p59, %p60
      %p63 = scmp.ne.s32.totalorder %s46, %s62
      %p64 = scmp.eq.s32.totalorder %s26, 0
      %p65 = por %p63, %p64
      %s66 = ssub.s32 %s27, %s39
      %p67 = scmp.eq.s32.totalorder %s66, 0
      %s69 = sadd.s32 %s68, 1
      %s70 = scalar_select %p67, %s68, %s69
      %p73 = pneg %p67
      %p74 = scmp.eq.s32.totalorder %s20, 1
      %p75 = por %p73, %p74
      %p76 = scmp.ne.s32.totalorder %s68, %s71
      %p77 = scmp.eq.s32.totalorder %s20, 0
      %p78 = por %p76, %p77
      %p79 = scmp.ne.s32.totalorder %s68, %s71
      %p80 = scmp.eq.s32.totalorder %s25, 1
      %p81 = por %p79, %p80
      %p82 = scmp.ne.s32.totalorder %s71, %s72
      %p83 = scmp.eq.s32.totalorder %s25, 0
      %p84 = por %p82, %p83
      %p85 = scmp.ne.s32.totalorder %s71, %s72
      %p86 = scmp.eq.s32.totalorder %s26, 1
      %p87 = por %p85, %p86
      %p89 = scmp.ne.s32.totalorder %s72, %s88
      %p90 = scmp.eq.s32.totalorder %s26, 0
      %p91 = por %p89, %p90
      %s92 = ssub.s32 %s27, %s39
      %p93 = scmp.eq.s32.totalorder %s92, 0
      %s95 = sadd.s32 %s94, 1
      %s96 = scalar_select %p93, %s94, %s95
      %p99 = pneg %p93
      %p100 = scmp.eq.s32.totalorder %s20, 1
      %p101 = por %p99, %p100
      %p102 = scmp.ne.s32.totalorder %s94, %s97
      %p103 = scmp.eq.s32.totalorder %s20, 0
      %p104 = por %p102, %p103
      %p105 = scmp.ne.s32.totalorder %s94, %s97
      %p106 = scmp.eq.s32.totalorder %s25, 1
      %p107 = por %p105, %p106
      %p108 = scmp.ne.s32.totalorder %s97, %s98
      %p109 = scmp.eq.s32.totalorder %s25, 0
      %p110 = por %p108, %p109
      %p111 = scmp.ne.s32.totalorder %s97, %s98
      %p112 = scmp.eq.s32.totalorder %s26, 1
      %p113 = por %p111, %p112
      %p115 = scmp.ne.s32.totalorder %s98, %s114
      %p116 = scmp.eq.s32.totalorder %s26, 0
      %p117 = por %p115, %p116
      %s118 = ssub.s32 %s27, %s39
      %s119 = ssub.s32 %s28, %s35
      %s120 = sor.u32 %s118, %s119
      %p121 = scmp.eq.s32.totalorder %s120, 0
      %s123 = sadd.s32 %s122, 1
      %s124 = scalar_select %p121, %s122, %s123
      %p127 = pneg %p121
      %p128 = scmp.eq.s32.totalorder %s20, 1
      %p129 = por %p127, %p128
      %p130 = scmp.ne.s32.totalorder %s122, %s125
      %p131 = scmp.eq.s32.totalorder %s20, 0
      %p132 = por %p130, %p131
      %p133 = scmp.ne.s32.totalorder %s122, %s125
      %p134 = scmp.eq.s32.totalorder %s25, 1
      %p135 = por %p133, %p134
      %p136 = scmp.ne.s32.totalorder %s125, %s126
      %p137 = scmp.eq.s32.totalorder %s25, 0
      %p138 = por %p136, %p137
      %p139 = scmp.ne.s32.totalorder %s125, %s126
      %p140 = scmp.eq.s32.totalorder %s26, 1
      %p141 = por %p139, %p140
      %p143 = scmp.ne.s32.totalorder %s126, %s142
      %p144 = scmp.eq.s32.totalorder %s26, 0
      %p145 = por %p143, %p144
      %s146 = ssub.s32 %s27, %s39
      %s147 = ssub.s32 %s28, %s35
      %s148 = sor.u32 %s146, %s147
      %p149 = scmp.eq.s32.totalorder %s148, 0
      %s151 = sadd.s32 %s150, 1
      %s152 = scalar_select %p149, %s150, %s151
      %p155 = pneg %p149
      %p156 = scmp.eq.s32.totalorder %s20, 1
      %p157 = por %p155, %p156
      %p158 = scmp.ne.s32.totalorder %s150, %s153
      %p159 = scmp.eq.s32.totalorder %s20, 0
      %p160 = por %p158, %p159
      %p161 = scmp.ne.s32.totalorder %s150, %s153
      %p162 = scmp.eq.s32.totalorder %s25, 1
      %p163 = por %p161, %p162
      %p164 = scmp.ne.s32.totalorder %s153, %s154
      %p165 = scmp.eq.s32.totalorder %s25, 0
      %p166 = por %p164, %p165
      %p167 = scmp.ne.s32.totalorder %s153, %s154
      %p168 = scmp.eq.s32.totalorder %s26, 1
      %p169 = por %p167, %p168
      %p171 = scmp.ne.s32.totalorder %s154, %s170
      %p172 = scmp.eq.s32.totalorder %s26, 0
      %p173 = por %p171, %p172
      %s174 = ssub.s32 %s27, %s39
      %p175 = scmp.eq.s32.totalorder %s174, 0
      %s177 = sadd.s32 %s176, 1
      %s178 = scalar_select %p175, %s176, %s177
      %p181 = pneg %p175
      %p182 = scmp.eq.s32.totalorder %s20, 1
      %p183 = por %p181, %p182
      %p184 = scmp.ne.s32.totalorder %s176, %s179
      %p185 = scmp.eq.s32.totalorder %s20, 0
      %p186 = por %p184, %p185
      %p187 = scmp.ne.s32.totalorder %s176, %s179
      %p188 = scmp.eq.s32.totalorder %s25, 1
      %p189 = por %p187, %p188
      %p190 = scmp.ne.s32.totalorder %s179, %s180
      %p191 = scmp.eq.s32.totalorder %s25, 0
      %p192 = por %p190, %p191
      %p193 = scmp.ne.s32.totalorder %s179, %s180
      %p194 = scmp.eq.s32.totalorder %s26, 1
      %p195 = por %p193, %p194
      %p197 = scmp.ne.s32.totalorder %s180, %s196
      %p198 = scmp.eq.s32.totalorder %s26, 0
      %p199 = por %p197, %p198
      %p200 = scmp.le.s32.totalorder 1, %s20
      %p201 = scmp.lt.s32.totalorder %s20, 3
      %p202 = pnand %p200, %p201
      %p203 = pneg %p202
      // Predicated region
      $region9: #{tpu_custom_call.1} parent=5 // pred_check
        _
      $region10: #{tpu_custom_call.1} parent=5 // pred_check_branch
        %205 = sbr.rel (%p202) target = $region12
      $region11: #{tpu_custom_call.1} parent=5 // pred_region
        %s206 = ssub.s32 %s20, 1
      $region12: #{tpu_custom_call.1} parent=5 // pred_fallthru
        _
      %p207 = scmp.lt.s32.totalorder %s20, 2
      // Predicated region
      $region13: #{tpu_custom_call.1} parent=5 // pred_check
        %p208 = pneg %p207
      $region14: #{tpu_custom_call.1} parent=5 // pred_check_branch
        %210 = sbr.rel (%p208) target = $region16
      $region15: #{tpu_custom_call.1} parent=5 // pred_region
        // Predicated region
        $region17: #{tpu_custom_call.1} parent=15 // pred_check
          %p211 = pneg %p52
        $region18: #{tpu_custom_call.1} parent=15 // pred_check_branch
          %213 = sbr.rel (%p211) target = $region20
        $region19: #{tpu_custom_call.1} parent=15 // pred_region
          %s214 = sand.u32 %s42, 1
          %s215 = scalar_lea.sflag [#allocation4], %s214
          %s216 = sand.u32 %s42, 1
          %s217 = smul.addr %s216, 16
          %s218 = scalar_lea.vmem [#allocation3], %s217
          %s220 = ssub.s32 256, 256
          %221 = vsyncadd %s215, %s220
          %s222 = smul.addr %s27, 2
          %s223 = smul.addr %s222, 128
          %s224 = scalar_lea.hbm %s0, %s223
          %s225 = sshll.u32 %s218, 4
          %s226 = int_to_ptr.vmem [resolvable:$true] %s225
          %231 = dma.hbm_to_vmem [thread:$0]  %s224, 256, %s226, %s215, 128, 128, 8
        $region20: #{tpu_custom_call.1} parent=15 // pred_fallthru
          _
        // Predicated region
        $region21: #{tpu_custom_call.1} parent=15 // pred_check
          %p232 = pneg %p78
        $region22: #{tpu_custom_call.1} parent=15 // pred_check_branch
          %234 = sbr.rel (%p232) target = $region24
        $region23: #{tpu_custom_call.1} parent=15 // pred_region
          %p235 = scmp.lt.s32.totalorder %s27, 1
          %s236 = scalar_select %p235, %s27, 1
          %s237 = smul.addr %s236, 4
          %s238 = scalar_lea.vmem %s1, %s237
        $region24: #{tpu_custom_call.1} parent=15 // pred_fallthru
          _
        // Predicated region
        $region25: #{tpu_custom_call.1} parent=15 // pred_check
          %p239 = pneg %p104
        $region26: #{tpu_custom_call.1} parent=15 // pred_check_branch
          %241 = sbr.rel (%p239) target = $region28
        $region27: #{tpu_custom_call.1} parent=15 // pred_region
          %p242 = scmp.lt.s32.totalorder %s27, 1
          %s243 = scalar_select %p242, %s27, 1
          %s244 = smul.addr %s243, 4
          %s245 = scalar_lea.vmem %s2, %s244
        $region28: #{tpu_custom_call.1} parent=15 // pred_fallthru
          _
        // Predicated region
        $region29: #{tpu_custom_call.1} parent=15 // pred_check
          %p246 = pneg %p132
        $region30: #{tpu_custom_call.1} parent=15 // pred_check_branch
          %248 = sbr.rel (%p246) target = $region32
        $region31: #{tpu_custom_call.1} parent=15 // pred_region
          %s249 = smul.u32 2, %s28
          %p250 = scmp.lt.s32.totalorder %s27, 1
          %s251 = scalar_select %p250, %s27, 1
          %p252 = scmp.lt.s32.totalorder %s249, 1
          %s253 = scalar_select %p252, %s249, 1
          %s254 = smul.addr %s251, 4
          %s255 = sadd.s32 %s253, %s254
          %s256 = smul.addr %s255, 4
          %s257 = scalar_lea.vmem %s3, %s256
          %s258 = smul.u32 2, %s28
        $region32: #{tpu_custom_call.1} parent=15 // pred_fallthru
          _
        // Predicated region
        $region33: #{tpu_custom_call.1} parent=15 // pred_check
          %p259 = pneg %p160
        $region34: #{tpu_custom_call.1} parent=15 // pred_check_branch
          %261 = sbr.rel (%p259) target = $region36
        $region35: #{tpu_custom_call.1} parent=15 // pred_region
          %s262 = sand.u32 %s150, 1
          %s263 = scalar_lea.sflag [#allocation7], %s262
          %s264 = sand.u32 %s150, 1
          %s265 = smul.addr %s264, 16
          %s266 = scalar_lea.vmem [#allocation6], %s265
          %s267 = smul.u32 2, %s28
          %s269 = ssub.s32 256, 256
          %270 = vsyncadd %s263, %s269
          %s271 = smul.addr %s27, 4
          %s272 = sadd.s32 %s267, %s271
          %s273 = smul.addr %s272, 64
          %s274 = scalar_lea.hbm %s4, %s273
          %s275 = sshll.u32 %s266, 4
          %s276 = int_to_ptr.vmem [resolvable:$true] %s275
          %281 = dma.hbm_to_vmem [thread:$0]  %s274, 256, %s276, %s263, 128, 128, 8
        $region36: #{tpu_custom_call.1} parent=15 // pred_fallthru
          _
      $region16: #{tpu_custom_call.1} parent=5 // pred_fallthru
        _
      %p282 = scmp.le.s32.totalorder 1, %s20
      %p283 = scmp.lt.s32.totalorder %s20, 3
      %p284 = pnand %p282, %p283
      %p285 = pneg %p284
      // Predicated region
      $region37: #{tpu_custom_call.1} parent=5 // pred_check
        _
      $region38: #{tpu_custom_call.1} parent=5 // pred_check_branch
        %287 = sbr.rel (%p284) target = $region40
      $region39: #{tpu_custom_call.1} parent=5 // pred_region
        %s288 = ssub.s32 %s20, 1
        %s289 = sand.u32 %s45, 1
        %s290 = scalar_lea.sflag [#allocation4], %s289
        %s291 = sand.u32 %s45, 1
        %s292 = smul.addr %s291, 16
        %s293 = scalar_lea.vmem [#allocation3], %s292
        // Predicated region
        $region41: #{tpu_custom_call.1} parent=39 // pred_check
          %p294 = pneg %p58
        $region42: #{tpu_custom_call.1} parent=39 // pred_check_branch
          %296 = sbr.rel (%p294) target = $region44
        $region43: #{tpu_custom_call.1} parent=39 // pred_region
          %297 = dma.done %s290, 256
        $region44: #{tpu_custom_call.1} parent=39 // pred_fallthru
          _
        %s298 = sand.u32 %s153, 1
        %s299 = scalar_lea.sflag [#allocation7], %s298
        %s300 = sand.u32 %s153, 1
        %s301 = smul.addr %s300, 16
        %s302 = scalar_lea.vmem [#allocation6], %s301
        // Predicated region
        $region45: #{tpu_custom_call.1} parent=39 // pred_check
          %p303 = pneg %p166
        $region46: #{tpu_custom_call.1} parent=39 // pred_check_branch
          %305 = sbr.rel (%p303) target = $region48
        $region47: #{tpu_custom_call.1} parent=39 // pred_region
          %306 = dma.done %s299, 256
        $region48: #{tpu_custom_call.1} parent=39 // pred_fallthru
          _
        %s307 = sand.u32 %s45, 1
        %s308 = scalar_lea.sflag [#allocation4], %s307
        %s309 = sand.u32 %s45, 1
        %s310 = smul.addr %s309, 16
        %s311 = scalar_lea.vmem [#allocation3], %s310
        %p312 = pneg %p58
        %p313 = pneg %p55
        %p314 = scmp.lt.s32.totalorder %s29, 1
        %s315 = scalar_select %p314, %s29, 1
        %s316 = smul.addr %s315, 4
        %s317 = scalar_lea.vmem %s1, %s316
        %p318 = pneg %p84
        %p319 = pneg %p81
        %p320 = scmp.lt.s32.totalorder %s29, 1
        %s321 = scalar_select %p320, %s29, 1
        %s322 = smul.addr %s321, 4
        %s323 = scalar_lea.vmem %s2, %s322
        %p324 = pneg %p110
        %p325 = pneg %p107
        %s326 = smul.u32 2, %s30
        %p327 = scmp.lt.s32.totalorder %s29, 1
        %s328 = scalar_select %p327, %s29, 1
        %p329 = scmp.lt.s32.totalorder %s326, 1
        %s330 = scalar_select %p329, %s326, 1
        %s331 = smul.addr %s328, 4
        %s332 = sadd.s32 %s330, %s331
        %s333 = smul.addr %s332, 4
        %s334 = scalar_lea.vmem %s3, %s333
        %p335 = pneg %p138
        %p336 = pneg %p135
        %s337 = sand.u32 %s153, 1
        %s338 = scalar_lea.sflag [#allocation7], %s337
        %s339 = sand.u32 %s153, 1
        %s340 = smul.addr %s339, 16
        %s341 = scalar_lea.vmem [#allocation6], %s340
        %p342 = pneg %p166
        %p343 = pneg %p163
        %p344 = pneg %p192
        %p345 = pneg %p189
        %s346 = sand.u32 %s179, 1
        %s347 = scalar_lea.sflag [#allocation5], %s346
        %s348 = sand.u32 %s179, 1
        %s349 = scalar_lea.vmem [#allocation8], %s348
        %p350 = scmp.lt.s32.totalorder %s29, 1
        %s351 = scalar_select %p350, %s29, 1
        %s352 = smul.addr %s351, 4
        %s353 = scalar_lea.vmem %s1, %s352
        %p354 = scmp.lt.s32.totalorder %s29, 1
        %s355 = scalar_select %p354, %s29, 1
        %s356 = smul.addr %s355, 4
        %s357 = scalar_lea.vmem %s2, %s356
        %s358 = smul.u32 2, %s30
        %p359 = scmp.lt.s32.totalorder %s29, 1
        %s360 = scalar_select %p359, %s29, 1
        %p361 = scmp.lt.s32.totalorder %s358, 1
        %s362 = scalar_select %p361, %s358, 1
        %s363 = smul.addr %s360, 4
        %s364 = sadd.s32 %s362, %s363
        %s365 = smul.addr %s364, 4
        %s366 = scalar_lea.vmem %s3, %s365
        %s367 = smul.u32 2, %s30
        %s368 = smul.u32 2, %s30
        %p370 = scmp.eq.s32.totalorder %s30, 0
        // Predicated region
        $region49: #{tpu_custom_call.1} parent=39 // pred_check
          %p371 = pneg %p370
        $region50: #{tpu_custom_call.1} parent=39 // pred_check_branch
          %373 = sbr.rel (%p371) target = $region52
        $region51: #{tpu_custom_call.1} parent=39 // pred_region
          %vm374 = vcmask 130048
          %375 = vst.msk [vmem:[#allocation2] sm:$0xff] %vm374, 0.0
          %376 = vst.msk [vmem:[#allocation2 + $0x8] sm:$0xff] %vm374, 0.0
        $region52: #{tpu_custom_call.1} parent=39 // pred_fallthru
          _
        %v377 = vld [vmem:[%s366] sm:$0xff]
        %v378 = vld [vmem:[%s366 + $0x8] sm:$0xff]
        %v379 = vunpack.c.l.bf16 %v377
        %v380 = vunpack.c.h.bf16 %v377
        %v381 = vunpack.c.l.bf16 %v378
        %v382 = vunpack.c.h.bf16 %v378
        %v383 = vmul.f32 %v379, 0.5
        %v384 = vmul.f32 %v380, 0.5
        %v385 = vmul.f32 %v381, 0.5
        %v386 = vmul.f32 %v382, 0.5
        %v387 = vtanh.pop %v383
        %v388 = vtanh.pop %v384
        %v389 = vtanh.pop %v385
        %v390 = vtanh.pop %v386
        %v391 = vmul.f32 %v387, 0.5
        %v392 = vmul.f32 %v388, 0.5
        %v393 = vmul.f32 %v389, 0.5
        %v394 = vmul.f32 %v390, 0.5
        %v395 = vadd.f32 %v391, 0.5
        %v396 = vadd.f32 %v392, 0.5
        %v397 = vadd.f32 %v393, 0.5
        %v398 = vadd.f32 %v394, 0.5
        %v399 = vld [vmem:[%s302] sm:$0xff]
        %v400 = vld [vmem:[%s302 + $0x8] sm:$0xff]
        %v401 = vld [vmem:[#allocation2] sm:$0xff]
        %v402 = vld [vmem:[#allocation2 + $0x8] sm:$0xff]
        %v403 = vpack.c.bf16 %v397, %v395
        %v404 = vpack.c.bf16 %v398, %v396
        %v407 = vunpack.c.l.b16 %v399
        %v408 = vunpack.c.h.b16 %v399
        %v409 = vunpack.c.l.b16 %v400
        %v410 = vunpack.c.h.b16 %v400
        %v411 = vpack.c.b16 %v409, %v407
        %v412 = vpack.c.b16 %v410, %v408
        %415 = vmatprep.subr.bf16.mxu0 %v404
        %416 = vmatpush1.bf16.xpose.msra.mxu0 %v403
        %417 = vmatprep.subr.bf16.mxu0 0
        %418 = vmatpush1.bf16.xpose.msra.mxu0 0
        %419 = vmatprep.subr.bf16.mxu0 0
        %420 = vmatpush1.bf16.xpose.msra.mxu0 0
        %421 = vmatprep.subr.bf16.mxu0 0
        %422 = vmatpush1.bf16.xpose.msra.mxu0 0
        %423 = vmatprep.subr.bf16.mxu0 0
        %424 = vmatpush1.bf16.xpose.msra.mxu0 0
        %425 = vmatprep.subr.bf16.mxu0 0
        %426 = vmatpush1.bf16.xpose.msra.mxu0 0
        %427 = vmatprep.subr.bf16.mxu0 0
        %428 = vmatpush1.bf16.xpose.msra.mxu0 0
        %429 = vmatprep.subr.bf16.mxu0 0
        %430 = vmatpush1.bf16.xpose.msra.mxu0 0
        %431 = vmatprep.subr.bf16.mxu0 0
        %432 = vmatpush1.bf16.xpose.msra.mxu0 0
        %433 = vmatprep.subr.bf16.mxu0 0
        %434 = vmatpush1.bf16.xpose.msra.mxu0 0
        %435 = vmatprep.subr.bf16.mxu0 0
        %436 = vmatpush1.bf16.xpose.msra.mxu0 0
        %437 = vmatprep.subr.bf16.mxu0 0
        %438 = vmatpush1.bf16.xpose.msra.mxu0 0
        %439 = vmatprep.subr.bf16.mxu0 0
        %440 = vmatpush1.bf16.xpose.msra.mxu0 0
        %441 = vmatprep.subr.bf16.mxu0 0
        %442 = vmatpush1.bf16.xpose.msra.mxu0 0
        %443 = vmatprep.subr.bf16.mxu0 0
        %444 = vmatpush1.bf16.xpose.msra.mxu0 0
        %445 = vmatprep.subr.bf16.mxu0 0
        %446 = vmatpush1.bf16.xpose.msra.mxu0 0
        %447 = vmatprep.mubr.bf16.mxu0 %v412
        %448 = vmatmul.mubr.bf16.gmra.mrb[0].mxu0 %v411
        %v449 = vpop.f32.mrb[0].mxu0
        %v450 = vadd.f32 0.0, %v449
        %v451 = vpop.f32.mrb[0].mxu0
        %v452 = vpop.f32.mrb[0].mxu0
        %v453 = vadd.f32 0.0, %v452
        %v454 = vpop.f32.mrb[0].mxu0
        %455 = vdwg.mxu0
        %v456 = vadd.f32 %v401, %v450
        %v457 = vadd.f32 %v402, %v453
        %vm458 = vcmask 130048
        %459 = vst.msk [vmem:[#allocation2] sm:$0xff] %vm458, %v456
        %460 = vst.msk [vmem:[#allocation2 + $0x8] sm:$0xff] %vm458, %v457
        // Predicated region
        $region53: #{tpu_custom_call.1} parent=39 // pred_check
          %p461 = pneg %p370
        $region54: #{tpu_custom_call.1} parent=39 // pred_check_branch
          %463 = sbr.rel (%p461) target = $region56
        $region55: #{tpu_custom_call.1} parent=39 // pred_region
          %v464 = vld [vmem:[%s293] sm:$0xff]
          %v465 = vld [vmem:[%s293 + $0x8] sm:$0xff]
          %466 = vmax.xlane.f32.xlu0 %v464
          %v467 = vpop.xlane.xlu0 %466
          %468 = vmax.xlane.f32.xlu0 %v465
          %v469 = vpop.xlane.xlu0 %468
          %v470 = vsub.f32 %v464, %v467
          %v471 = vsub.f32 %v465, %v469
          %v472 = vmul.f32 %v470, 1.442695
          %v473 = vpow.pop %v472
          %v474 = vmul.f32 %v471, 1.442695
          %v475 = vpow.pop %v474
          %476 = vadd.xlane.f32.xlu0 %v473
          %v477 = vpop.xlane.xlu0 %476
          %478 = vadd.xlane.f32.xlu0 %v475
          %v479 = vpop.xlane.xlu0 %478
          %v480 = vld [vmem:[%s353] sm:$0x7]
          %481 = vmatprep.subr.mxu0 0.0
          %v482 = vand.u32 %v473, 4294901760
          %483 = vmatpush1.xpose.msra.mxu0 %v482
          %484 = vmatprep.subr.mxu0 0.0
          %v485 = vand.u32 %v475, 4294901760
          %486 = vmatpush1.xpose.msra.mxu0 %v485
          %487 = vmatprep.subr.mxu0 0.0
          %488 = vmatpush1.xpose.msra.mxu0 0.0
          %489 = vmatprep.subr.mxu0 0.0
          %490 = vmatpush1.xpose.msra.mxu0 0.0
          %491 = vmatprep.subr.mxu0 0.0
          %492 = vmatpush1.xpose.msra.mxu0 0.0
          %493 = vmatprep.subr.mxu0 0.0
          %494 = vmatpush1.xpose.msra.mxu0 0.0
          %495 = vmatprep.subr.mxu0 0.0
          %496 = vmatpush1.xpose.msra.mxu0 0.0
          %497 = vmatprep.subr.mxu0 0.0
          %498 = vmatpush1.xpose.msra.mxu0 0.0
          %499 = vmatprep.subr.mxu0 0.0
          %500 = vmatpush1.xpose.msra.mxu0 0.0
          %501 = vmatprep.subr.mxu0 0.0
          %502 = vmatpush1.xpose.msra.mxu0 0.0
          %503 = vmatprep.subr.mxu0 0.0
          %504 = vmatpush1.xpose.msra.mxu0 0.0
          %505 = vmatprep.subr.mxu0 0.0
          %506 = vmatpush1.xpose.msra.mxu0 0.0
          %507 = vmatprep.subr.mxu0 0.0
          %508 = vmatpush1.xpose.msra.mxu0 0.0
          %509 = vmatprep.subr.mxu0 0.0
          %510 = vmatpush1.xpose.msra.mxu0 0.0
          %511 = vmatprep.subr.mxu0 0.0
          %512 = vmatpush1.xpose.msra.mxu0 0.0
          %513 = vmatprep.subr.mxu0 0.0
          %514 = vmatpush1.xpose.msra.mxu0 0.0
          %515 = vmatprep.subr.mxu0 0.0
          %516 = vmatpush1.xpose.msra.mxu0 0.0
          %517 = vmatprep.subr.mxu0 0.0
          %518 = vmatpush1.xpose.msra.mxu0 0.0
          %519 = vmatprep.subr.mxu0 0.0
          %520 = vmatpush1.xpose.msra.mxu0 0.0
          %521 = vmatprep.subr.mxu0 0.0
          %522 = vmatpush1.xpose.msra.mxu0 0.0
          %523 = vmatprep.subr.mxu0 0.0
          %524 = vmatpush1.xpose.msra.mxu0 0.0
          %525 = vmatprep.subr.mxu0 0.0
          %526 = vmatpush1.xpose.msra.mxu0 0.0
          %527 = vmatprep.subr.mxu0 0.0
          %528 = vmatpush1.xpose.msra.mxu0 0.0
          %529 = vmatprep.subr.mxu0 0.0
          %530 = vmatpush1.xpose.msra.mxu0 0.0
          %531 = vmatprep.subr.mxu0 0.0
          %532 = vmatpush1.xpose.msra.mxu0 0.0
          %533 = vmatprep.subr.mxu0 0.0
          %534 = vmatpush1.xpose.msra.mxu0 0.0
          %535 = vmatprep.subr.mxu0 0.0
          %536 = vmatpush1.xpose.msra.mxu0 0.0
          %537 = vmatprep.subr.mxu0 0.0
          %538 = vmatpush1.xpose.msra.mxu0 0.0
          %539 = vmatprep.subr.mxu0 0.0
          %540 = vmatpush1.xpose.msra.mxu0 0.0
          %541 = vmatprep.subr.mxu0 0.0
          %542 = vmatpush1.xpose.msra.mxu0 0.0
          %543 = vmatprep.subr.mxu0 0.0
          %544 = vmatpush1.xpose.msra.mxu0 0.0
          %545 = vmatprep.subr.mxu0 0.0
          %546 = vmatpush1.xpose.msra.mxu0 0.0
          %547 = vmatprep.mubr.f32.mxu0 0.0
          %v548 = vand.u32 %v480, 4294901760
          %v549 = vsub.f32 %v480, %v548
          %v550 = vand.u32 %v549, 4294901760
          %v551 = vsub.f32 %v549, %v550
          %v552 = vand.u32 %v551, 4294901760
          %553 = vmatmul.mubr.f32.gmra.mrb[0].mxu0 %v552
          %v554 = vpop.f32.mrb[0].mxu0
          %v555 = vadd.f32 0.0, %v554
          %v556 = vpop.f32.mrb[0].mxu0
          %557 = vdwg.mxu0
          %558 = vmatprep.subr.mxu0 0.0
          %v559 = vand.u32 %v473, 4294901760
          %v560 = vsub.f32 %v473, %v559
          %v561 = vand.u32 %v560, 4294901760
          %v562 = vsub.f32 %v560, %v561
          %v563 = vand.u32 %v562, 4294901760
          %564 = vmatpush1.xpose.msra.mxu0 %v563
          %565 = vmatprep.subr.mxu0 0.0
          %v566 = vand.u32 %v475, 4294901760
          %v567 = vsub.f32 %v475, %v566
          %v568 = vand.u32 %v567, 4294901760
          %v569 = vsub.f32 %v567, %v568
          %v570 = vand.u32 %v569, 4294901760
          %571 = vmatpush1.xpose.msra.mxu0 %v570
          %572 = vmatprep.subr.mxu0 0.0
          %573 = vmatpush1.xpose.msra.mxu0 0.0
          %574 = vmatprep.subr.mxu0 0.0
          %575 = vmatpush1.xpose.msra.mxu0 0.0
          %576 = vmatprep.subr.mxu0 0.0
          %577 = vmatpush1.xpose.msra.mxu0 0.0
          %578 = vmatprep.subr.mxu0 0.0
          %579 = vmatpush1.xpose.msra.mxu0 0.0
          %580 = vmatprep.subr.mxu0 0.0
          %581 = vmatpush1.xpose.msra.mxu0 0.0
          %582 = vmatprep.subr.mxu0 0.0
          %583 = vmatpush1.xpose.msra.mxu0 0.0
          %584 = vmatprep.subr.mxu0 0.0
          %585 = vmatpush1.xpose.msra.mxu0 0.0
          %586 = vmatprep.subr.mxu0 0.0
          %587 = vmatpush1.xpose.msra.mxu0 0.0
          %588 = vmatprep.subr.mxu0 0.0
          %589 = vmatpush1.xpose.msra.mxu0 0.0
          %590 = vmatprep.subr.mxu0 0.0
          %591 = vmatpush1.xpose.msra.mxu0 0.0
          %592 = vmatprep.subr.mxu0 0.0
          %593 = vmatpush1.xpose.msra.mxu0 0.0
          %594 = vmatprep.subr.mxu0 0.0
          %595 = vmatpush1.xpose.msra.mxu0 0.0
          %596 = vmatprep.subr.mxu0 0.0
          %597 = vmatpush1.xpose.msra.mxu0 0.0
          %598 = vmatprep.subr.mxu0 0.0
          %599 = vmatpush1.xpose.msra.mxu0 0.0
          %600 = vmatprep.subr.mxu0 0.0
          %601 = vmatpush1.xpose.msra.mxu0 0.0
          %602 = vmatprep.subr.mxu0 0.0
          %603 = vmatpush1.xpose.msra.mxu0 0.0
          %604 = vmatprep.subr.mxu0 0.0
          %605 = vmatpush1.xpose.msra.mxu0 0.0
          %606 = vmatprep.subr.mxu0 0.0
          %607 = vmatpush1.xpose.msra.mxu0 0.0
          %608 = vmatprep.subr.mxu0 0.0
          %609 = vmatpush1.xpose.msra.mxu0 0.0
          %610 = vmatprep.subr.mxu0 0.0
          %611 = vmatpush1.xpose.msra.mxu0 0.0
          %612 = vmatprep.subr.mxu0 0.0
          %613 = vmatpush1.xpose.msra.mxu0 0.0
          %614 = vmatprep.subr.mxu0 0.0
          %615 = vmatpush1.xpose.msra.mxu0 0.0
          %616 = vmatprep.subr.mxu0 0.0
          %617 = vmatpush1.xpose.msra.mxu0 0.0
          %618 = vmatprep.subr.mxu0 0.0
          %619 = vmatpush1.xpose.msra.mxu0 0.0
          %620 = vmatprep.subr.mxu0 0.0
          %621 = vmatpush1.xpose.msra.mxu0 0.0
          %622 = vmatprep.subr.mxu0 0.0
          %623 = vmatpush1.xpose.msra.mxu0 0.0
          %624 = vmatprep.subr.mxu0 0.0
          %625 = vmatpush1.xpose.msra.mxu0 0.0
          %626 = vmatprep.subr.mxu0 0.0
          %627 = vmatpush1.xpose.msra.mxu0 0.0
          %628 = vmatprep.subr.mxu0 0.0
          %629 = vmatpush1.xpose.msra.mxu0 0.0
          %630 = vmatprep.subr.mxu0 0.0
          %631 = vmatpush1.xpose.msra.mxu0 0.0
          %632 = vmatprep.mubr.f32.mxu0 0.0
          %v633 = vand.u32 %v480, 4294901760
          %634 = vmatmul.mubr.f32.gmra.mrb[0].mxu0 %v633
          %v635 = vpop.f32.mrb[0].mxu0
          %v636 = vadd.f32 %v555, %v635
          %v637 = vpop.f32.mrb[0].mxu0
          %638 = vdwg.mxu0
          %639 = vmatprep.subr.mxu0 0.0
          %v640 = vand.u32 %v473, 4294901760
          %v641 = vsub.f32 %v473, %v640
          %642 = vmatpush1.xpose.msra.mxu0 %v641
          %643 = vmatprep.subr.mxu0 0.0
          %v644 = vand.u32 %v475, 4294901760
          %v645 = vsub.f32 %v475, %v644
          %646 = vmatpush1.xpose.msra.mxu0 %v645
          %647 = vmatprep.subr.mxu0 0.0
          %648 = vmatpush1.xpose.msra.mxu0 0.0
          %649 = vmatprep.subr.mxu0 0.0
          %650 = vmatpush1.xpose.msra.mxu0 0.0
          %651 = vmatprep.subr.mxu0 0.0
          %652 = vmatpush1.xpose.msra.mxu0 0.0
          %653 = vmatprep.subr.mxu0 0.0
          %654 = vmatpush1.xpose.msra.mxu0 0.0
          %655 = vmatprep.subr.mxu0 0.0
          %656 = vmatpush1.xpose.msra.mxu0 0.0
          %657 = vmatprep.subr.mxu0 0.0
          %658 = vmatpush1.xpose.msra.mxu0 0.0
          %659 = vmatprep.subr.mxu0 0.0
          %660 = vmatpush1.xpose.msra.mxu0 0.0
          %661 = vmatprep.subr.mxu0 0.0
          %662 = vmatpush1.xpose.msra.mxu0 0.0
          %663 = vmatprep.subr.mxu0 0.0
          %664 = vmatpush1.xpose.msra.mxu0 0.0
          %665 = vmatprep.subr.mxu0 0.0
          %666 = vmatpush1.xpose.msra.mxu0 0.0
          %667 = vmatprep.subr.mxu0 0.0
          %668 = vmatpush1.xpose.msra.mxu0 0.0
          %669 = vmatprep.subr.mxu0 0.0
          %670 = vmatpush1.xpose.msra.mxu0 0.0
          %671 = vmatprep.subr.mxu0 0.0
          %672 = vmatpush1.xpose.msra.mxu0 0.0
          %673 = vmatprep.subr.mxu0 0.0
          %674 = vmatpush1.xpose.msra.mxu0 0.0
          %675 = vmatprep.subr.mxu0 0.0
          %676 = vmatpush1.xpose.msra.mxu0 0.0
          %677 = vmatprep.subr.mxu0 0.0
          %678 = vmatpush1.xpose.msra.mxu0 0.0
          %679 = vmatprep.subr.mxu0 0.0
          %680 = vmatpush1.xpose.msra.mxu0 0.0
          %681 = vmatprep.subr.mxu0 0.0
          %682 = vmatpush1.xpose.msra.mxu0 0.0
          %683 = vmatprep.subr.mxu0 0.0
          %684 = vmatpush1.xpose.msra.mxu0 0.0
          %685 = vmatprep.subr.mxu0 0.0
          %686 = vmatpush1.xpose.msra.mxu0 0.0
          %687 = vmatprep.subr.mxu0 0.0
          %688 = vmatpush1.xpose.msra.mxu0 0.0
          %689 = vmatprep.subr.mxu0 0.0
          %690 = vmatpush1.xpose.msra.mxu0 0.0
          %691 = vmatprep.subr.mxu0 0.0
          %692 = vmatpush1.xpose.msra.mxu0 0.0
          %693 = vmatprep.subr.mxu0 0.0
          %694 = vmatpush1.xpose.msra.mxu0 0.0
          %695 = vmatprep.subr.mxu0 0.0
          %696 = vmatpush1.xpose.msra.mxu0 0.0
          %697 = vmatprep.subr.mxu0 0.0
          %698 = vmatpush1.xpose.msra.mxu0 0.0
          %699 = vmatprep.subr.mxu0 0.0
          %700 = vmatpush1.xpose.msra.mxu0 0.0
          %701 = vmatprep.subr.mxu0 0.0
          %702 = vmatpush1.xpose.msra.mxu0 0.0
          %703 = vmatprep.subr.mxu0 0.0
          %704 = vmatpush1.xpose.msra.mxu0 0.0
          %705 = vmatprep.subr.mxu0 0.0
          %706 = vmatpush1.xpose.msra.mxu0 0.0
          %707 = vmatprep.mubr.f32.mxu0 0.0
          %v708 = vand.u32 %v480, 4294901760
          %v709 = vsub.f32 %v480, %v708
          %710 = vmatmul.mubr.f32.gmra.mrb[0].mxu0 %v709
          %v711 = vpop.f32.mrb[0].mxu0
          %v712 = vadd.f32 %v636, %v711
          %v713 = vpop.f32.mrb[0].mxu0
          %714 = vdwg.mxu0
          %715 = vmatprep.subr.mxu0 0.0
          %v716 = vand.u32 %v473, 4294901760
          %717 = vmatpush1.xpose.msra.mxu0 %v716
          %718 = vmatprep.subr.mxu0 0.0
          %v719 = vand.u32 %v475, 4294901760
          %720 = vmatpush1.xpose.msra.mxu0 %v719
          %721 = vmatprep.subr.mxu0 0.0
          %722 = vmatpush1.xpose.msra.mxu0 0.0
          %723 = vmatprep.subr.mxu0 0.0
          %724 = vmatpush1.xpose.msra.mxu0 0.0
          %725 = vmatprep.subr.mxu0 0.0
          %726 = vmatpush1.xpose.msra.mxu0 0.0
          %727 = vmatprep.subr.mxu0 0.0
          %728 = vmatpush1.xpose.msra.mxu0 0.0
          %729 = vmatprep.subr.mxu0 0.0
          %730 = vmatpush1.xpose.msra.mxu0 0.0
          %731 = vmatprep.subr.mxu0 0.0
          %732 = vmatpush1.xpose.msra.mxu0 0.0
          %733 = vmatprep.subr.mxu0 0.0
          %734 = vmatpush1.xpose.msra.mxu0 0.0
          %735 = vmatprep.subr.mxu0 0.0
          %736 = vmatpush1.xpose.msra.mxu0 0.0
          %737 = vmatprep.subr.mxu0 0.0
          %738 = vmatpush1.xpose.msra.mxu0 0.0
          %739 = vmatprep.subr.mxu0 0.0
          %740 = vmatpush1.xpose.msra.mxu0 0.0
          %741 = vmatprep.subr.mxu0 0.0
          %742 = vmatpush1.xpose.msra.mxu0 0.0
          %743 = vmatprep.subr.mxu0 0.0
          %744 = vmatpush1.xpose.msra.mxu0 0.0
          %745 = vmatprep.subr.mxu0 0.0
          %746 = vmatpush1.xpose.msra.mxu0 0.0
          %747 = vmatprep.subr.mxu0 0.0
          %748 = vmatpush1.xpose.msra.mxu0 0.0
          %749 = vmatprep.subr.mxu0 0.0
          %750 = vmatpush1.xpose.msra.mxu0 0.0
          %751 = vmatprep.subr.mxu0 0.0
          %752 = vmatpush1.xpose.msra.mxu0 0.0
          %753 = vmatprep.subr.mxu0 0.0
          %754 = vmatpush1.xpose.msra.mxu0 0.0
          %755 = vmatprep.subr.mxu0 0.0
          %756 = vmatpush1.xpose.msra.mxu0 0.0
          %757 = vmatprep.subr.mxu0 0.0
          %758 = vmatpush1.xpose.msra.mxu0 0.0
          %759 = vmatprep.subr.mxu0 0.0
          %760 = vmatpush1.xpose.msra.mxu0 0.0
          %761 = vmatprep.subr.mxu0 0.0
          %762 = vmatpush1.xpose.msra.mxu0 0.0
          %763 = vmatprep.subr.mxu0 0.0
          %764 = vmatpush1.xpose.msra.mxu0 0.0
          %765 = vmatprep.subr.mxu0 0.0
          %766 = vmatpush1.xpose.msra.mxu0 0.0
          %767 = vmatprep.subr.mxu0 0.0
          %768 = vmatpush1.xpose.msra.mxu0 0.0
          %769 = vmatprep.subr.mxu0 0.0
          %770 = vmatpush1.xpose.msra.mxu0 0.0
          %771 = vmatprep.subr.mxu0 0.0
          %772 = vmatpush1.xpose.msra.mxu0 0.0
          %773 = vmatprep.subr.mxu0 0.0
          %774 = vmatpush1.xpose.msra.mxu0 0.0
          %775 = vmatprep.subr.mxu0 0.0
          %776 = vmatpush1.xpose.msra.mxu0 0.0
          %777 = vmatprep.subr.mxu0 0.0
          %778 = vmatpush1.xpose.msra.mxu0 0.0
          %779 = vmatprep.subr.mxu0 0.0
          %780 = vmatpush1.xpose.msra.mxu0 0.0
          %781 = vmatprep.mubr.f32.mxu0 0.0
          %v782 = vand.u32 %v480, 4294901760
          %v783 = vsub.f32 %v480, %v782
          %v784 = vand.u32 %v783, 4294901760
          %785 = vmatmul.mubr.f32.gmra.mrb[0].mxu0 %v784
          %v786 = vpop.f32.mrb[0].mxu0
          %v787 = vadd.f32 %v712, %v786
          %v788 = vpop.f32.mrb[0].mxu0
          %789 = vdwg.mxu0
          %790 = vmatprep.subr.mxu0 0.0
          %v791 = vand.u32 %v473, 4294901760
          %v792 = vsub.f32 %v473, %v791
          %v793 = vand.u32 %v792, 4294901760
          %794 = vmatpush1.xpose.msra.mxu0 %v793
          %795 = vmatprep.subr.mxu0 0.0
          %v796 = vand.u32 %v475, 4294901760
          %v797 = vsub.f32 %v475, %v796
          %v798 = vand.u32 %v797, 4294901760
          %799 = vmatpush1.xpose.msra.mxu0 %v798
          %800 = vmatprep.subr.mxu0 0.0
          %801 = vmatpush1.xpose.msra.mxu0 0.0
          %802 = vmatprep.subr.mxu0 0.0
          %803 = vmatpush1.xpose.msra.mxu0 0.0
          %804 = vmatprep.subr.mxu0 0.0
          %805 = vmatpush1.xpose.msra.mxu0 0.0
          %806 = vmatprep.subr.mxu0 0.0
          %807 = vmatpush1.xpose.msra.mxu0 0.0
          %808 = vmatprep.subr.mxu0 0.0
          %809 = vmatpush1.xpose.msra.mxu0 0.0
          %810 = vmatprep.subr.mxu0 0.0
          %811 = vmatpush1.xpose.msra.mxu0 0.0
          %812 = vmatprep.subr.mxu0 0.0
          %813 = vmatpush1.xpose.msra.mxu0 0.0
          %814 = vmatprep.subr.mxu0 0.0
          %815 = vmatpush1.xpose.msra.mxu0 0.0
          %816 = vmatprep.subr.mxu0 0.0
          %817 = vmatpush1.xpose.msra.mxu0 0.0
          %818 = vmatprep.subr.mxu0 0.0
          %819 = vmatpush1.xpose.msra.mxu0 0.0
          %820 = vmatprep.subr.mxu0 0.0
          %821 = vmatpush1.xpose.msra.mxu0 0.0
          %822 = vmatprep.subr.mxu0 0.0
          %823 = vmatpush1.xpose.msra.mxu0 0.0
          %824 = vmatprep.subr.mxu0 0.0
          %825 = vmatpush1.xpose.msra.mxu0 0.0
          %826 = vmatprep.subr.mxu0 0.0
          %827 = vmatpush1.xpose.msra.mxu0 0.0
          %828 = vmatprep.subr.mxu0 0.0
          %829 = vmatpush1.xpose.msra.mxu0 0.0
          %830 = vmatprep.subr.mxu0 0.0
          %831 = vmatpush1.xpose.msra.mxu0 0.0
          %832 = vmatprep.subr.mxu0 0.0
          %833 = vmatpush1.xpose.msra.mxu0 0.0
          %834 = vmatprep.subr.mxu0 0.0
          %835 = vmatpush1.xpose.msra.mxu0 0.0
          %836 = vmatprep.subr.mxu0 0.0
          %837 = vmatpush1.xpose.msra.mxu0 0.0
          %838 = vmatprep.subr.mxu0 0.0
          %839 = vmatpush1.xpose.msra.mxu0 0.0
          %840 = vmatprep.subr.mxu0 0.0
          %841 = vmatpush1.xpose.msra.mxu0 0.0
          %842 = vmatprep.subr.mxu0 0.0
          %843 = vmatpush1.xpose.msra.mxu0 0.0
          %844 = vmatprep.subr.mxu0 0.0
          %845 = vmatpush1.xpose.msra.mxu0 0.0
          %846 = vmatprep.subr.mxu0 0.0
          %847 = vmatpush1.xpose.msra.mxu0 0.0
          %848 = vmatprep.subr.mxu0 0.0
          %849 = vmatpush1.xpose.msra.mxu0 0.0
          %850 = vmatprep.subr.mxu0 0.0
          %851 = vmatpush1.xpose.msra.mxu0 0.0
          %852 = vmatprep.subr.mxu0 0.0
          %853 = vmatpush1.xpose.msra.mxu0 0.0
          %854 = vmatprep.subr.mxu0 0.0
          %855 = vmatpush1.xpose.msra.mxu0 0.0
          %856 = vmatprep.subr.mxu0 0.0
          %857 = vmatpush1.xpose.msra.mxu0 0.0
          %858 = vmatprep.subr.mxu0 0.0
          %859 = vmatpush1.xpose.msra.mxu0 0.0
          %860 = vmatprep.mubr.f32.mxu0 0.0
          %v861 = vand.u32 %v480, 4294901760
          %862 = vmatmul.mubr.f32.gmra.mrb[0].mxu0 %v861
          %v863 = vpop.f32.mrb[0].mxu0
          %v864 = vadd.f32 %v787, %v863
          %v865 = vpop.f32.mrb[0].mxu0
          %866 = vdwg.mxu0
          %867 = vmatprep.subr.mxu0 0.0
          %v868 = vand.u32 %v473, 4294901760
          %869 = vmatpush1.xpose.msra.mxu0 %v868
          %870 = vmatprep.subr.mxu0 0.0
          %v871 = vand.u32 %v475, 4294901760
          %872 = vmatpush1.xpose.msra.mxu0 %v871
          %873 = vmatprep.subr.mxu0 0.0
          %874 = vmatpush1.xpose.msra.mxu0 0.0
          %875 = vmatprep.subr.mxu0 0.0
          %876 = vmatpush1.xpose.msra.mxu0 0.0
          %877 = vmatprep.subr.mxu0 0.0
          %878 = vmatpush1.xpose.msra.mxu0 0.0
          %879 = vmatprep.subr.mxu0 0.0
          %880 = vmatpush1.xpose.msra.mxu0 0.0
          %881 = vmatprep.subr.mxu0 0.0
          %882 = vmatpush1.xpose.msra.mxu0 0.0
          %883 = vmatprep.subr.mxu0 0.0
          %884 = vmatpush1.xpose.msra.mxu0 0.0
          %885 = vmatprep.subr.mxu0 0.0
          %886 = vmatpush1.xpose.msra.mxu0 0.0
          %887 = vmatprep.subr.mxu0 0.0
          %888 = vmatpush1.xpose.msra.mxu0 0.0
          %889 = vmatprep.subr.mxu0 0.0
          %890 = vmatpush1.xpose.msra.mxu0 0.0
          %891 = vmatprep.subr.mxu0 0.0
          %892 = vmatpush1.xpose.msra.mxu0 0.0
          %893 = vmatprep.subr.mxu0 0.0
          %894 = vmatpush1.xpose.msra.mxu0 0.0
          %895 = vmatprep.subr.mxu0 0.0
          %896 = vmatpush1.xpose.msra.mxu0 0.0
          %897 = vmatprep.subr.mxu0 0.0
          %898 = vmatpush1.xpose.msra.mxu0 0.0
          %899 = vmatprep.subr.mxu0 0.0
          %900 = vmatpush1.xpose.msra.mxu0 0.0
          %901 = vmatprep.subr.mxu0 0.0
          %902 = vmatpush1.xpose.msra.mxu0 0.0
          %903 = vmatprep.subr.mxu0 0.0
          %904 = vmatpush1.xpose.msra.mxu0 0.0
          %905 = vmatprep.subr.mxu0 0.0
          %906 = vmatpush1.xpose.msra.mxu0 0.0
          %907 = vmatprep.subr.mxu0 0.0
          %908 = vmatpush1.xpose.msra.mxu0 0.0
          %909 = vmatprep.subr.mxu0 0.0
          %910 = vmatpush1.xpose.msra.mxu0 0.0
          %911 = vmatprep.subr.mxu0 0.0
          %912 = vmatpush1.xpose.msra.mxu0 0.0
          %913 = vmatprep.subr.mxu0 0.0
          %914 = vmatpush1.xpose.msra.mxu0 0.0
          %915 = vmatprep.subr.mxu0 0.0
          %916 = vmatpush1.xpose.msra.mxu0 0.0
          %917 = vmatprep.subr.mxu0 0.0
          %918 = vmatpush1.xpose.msra.mxu0 0.0
          %919 = vmatprep.subr.mxu0 0.0
          %920 = vmatpush1.xpose.msra.mxu0 0.0
          %921 = vmatprep.subr.mxu0 0.0
          %922 = vmatpush1.xpose.msra.mxu0 0.0
          %923 = vmatprep.subr.mxu0 0.0
          %924 = vmatpush1.xpose.msra.mxu0 0.0
          %925 = vmatprep.subr.mxu0 0.0
          %926 = vmatpush1.xpose.msra.mxu0 0.0
          %927 = vmatprep.subr.mxu0 0.0
          %928 = vmatpush1.xpose.msra.mxu0 0.0
          %929 = vmatprep.subr.mxu0 0.0
          %930 = vmatpush1.xpose.msra.mxu0 0.0
          %931 = vmatprep.subr.mxu0 0.0
          %932 = vmatpush1.xpose.msra.mxu0 0.0
          %933 = vmatprep.mubr.f32.mxu0 0.0
          %v934 = vand.u32 %v480, 4294901760
          %935 = vmatmul.mubr.f32.gmra.mrb[0].mxu0 %v934
          %v936 = vpop.f32.mrb[0].mxu0
          %v937 = vadd.f32 %v864, %v936
          %v938 = vpop.f32.mrb[0].mxu0
          %939 = vdwg.mxu0
          %v940 = vrcp.pop %v477
          %v941 = vmul.f32 1.0, %v940
          %v942 = vrcp.pop %v479
          %v943 = vmul.f32 1.0, %v942
          %v946 = vlaneseq
          %v947 = vand.u32 %v946, 127
          %v948 = vlaneseq
          %v949 = vshrl.u32 %v948, 7
          %v950 = vsub.s32 %v947, %v949
          %v951 = vrot.slane %v941, %v950
          %v952 = vadd.s32 %v947, 4294967288
          %v953 = vlaneseq
          %v954 = vshrl.u32 %v953, 7
          %v955 = vsub.s32 %v952, %v954
          %v956 = vrot.slane %v943, %v955
          %vm957 = vcmask 130112
          %v958 = vsel %vm957, %v956, %v951
          %vm959 = vcmask 1042434
          %v960 = vsel %vm959, %v958, %v958
          %v962 = vmul.f32 %v937, %v960
          %v963 = vld [vmem:[#allocation2] sm:$0xff]
          %v964 = vld [vmem:[%s357] sm:$0x7]
          %966 = vset.pattern.permute.xlu0 0
          %967 = vperm.xlu0 %966, %v964
          %v968 = vpop.permute.xlu0 %967
          %v970 = vlaneseq
          %v971 = vshrl.u32 %v970, 7
          %v972 = vsub.s32 3, %v971
          %v973 = vrot.slane %v963, %v972
          %v974 = vadd.f32 %v968, %v973
          %v975 = vsub.f32 %v974, %v963
          %v976 = vadd.f32 %v975, 1e-07
          %v977 = vrcp.pop %v976
          %v978 = vmul.f32 %v963, %v977
          %v979 = vsub.f32 %v962, %v978
          %v980 = vand.u32 2147483647, %v979
          %vm981 = vcmp.lt.f32.partialorder %v980, 1.0
          %v982 = vmul.f32 %v979, 0.5
          %v983 = vmul.f32 %v982, %v979
          %v984 = vsub.f32 %v980, 0.5
          %v985 = vsel %vm981, %v983, %v984
          %vm986 = vcmask 124928
          %v987 = vsel %vm986, %v985, 0.0
          %v988 = vrot.slane %v987, 4
          %v989 = vadd.f32 %v987, %v988
          %v990 = vrot.slane %v989, 2
          %v991 = vadd.f32 %v989, %v990
          %v992 = vrot.slane %v991, 1
          %v993 = vadd.f32 %v991, %v992
          %v994 = vsel %vm458, %v993, 0.0
          %995 = vadd.xlane.f32.xlu0 %v994
          %v996 = vpop.xlane.xlu0 %995
          %997 = vst [vmem:[%s349] sm:$0x1] %v996
        $region56: #{tpu_custom_call.1} parent=39 // pred_fallthru
          _
        %s998 = sand.u32 %s179, 1
        %s999 = scalar_lea.sflag [#allocation5], %s998
        %s1000 = sand.u32 %s179, 1
        %s1001 = scalar_lea.vmem [#allocation8], %s1000
        // Predicated region
        $region57: #{tpu_custom_call.1} parent=39 // pred_check
          %p1002 = pneg %p189
        $region58: #{tpu_custom_call.1} parent=39 // pred_check_branch
          %1004 = sbr.rel (%p1002) target = $region60
        $region59: #{tpu_custom_call.1} parent=39 // pred_region
          %s1006 = ssub.s32 16, 16
          %1007 = vsyncadd %s999, %s1006
          %s1008 = smul.addr %s29, 16
          %s1009 = scalar_lea.hbm %s5, %s1008
          %s1011 = sshll.u32 %s1001, 4
          %s1012 = int_to_ptr.vmem [resolvable:$true] %s1011
          %1014 = dma.vmem_to_hbm [thread:$0]  %s1012, 16, %s1009, %s999
        $region60: #{tpu_custom_call.1} parent=39 // pred_fallthru
          _
      $region40: #{tpu_custom_call.1} parent=5 // pred_fallthru
        _
      %p1015 = scmp.le.s32.totalorder 2, %s20
      // Predicated region
      $region61: #{tpu_custom_call.1} parent=5 // pred_check
        %p1016 = pneg %p1015
      $region62: #{tpu_custom_call.1} parent=5 // pred_check_branch
        %1018 = sbr.rel (%p1016) target = $region64
      $region63: #{tpu_custom_call.1} parent=5 // pred_region
        %s1019 = ssub.s32 %s20, 2
        // Predicated region
        $region65: #{tpu_custom_call.1} parent=63 // pred_check
          %p1020 = pneg %p195
        $region66: #{tpu_custom_call.1} parent=63 // pred_check_branch
          %1022 = sbr.rel (%p1020) target = $region68
        $region67: #{tpu_custom_call.1} parent=63 // pred_region
          %s1023 = sand.u32 %s180, 1
          %s1024 = scalar_lea.sflag [#allocation5], %s1023
          %s1025 = sand.u32 %s180, 1
          %s1026 = scalar_lea.vmem [#allocation8], %s1025
          %1027 = dma.done %s1024, 16
        $region68: #{tpu_custom_call.1} parent=63 // pred_fallthru
          _
      $region64: #{tpu_custom_call.1} parent=5 // pred_fallthru
        _
    $region6: #{tpu_custom_call.1} parent=1 // loop_footer
      %s24 = sadd.s32 1, %s20
    $region7: #{tpu_custom_call.1} parent=1 // loop_footer_branch
      %19 = sbr.rel target = $region3
    $region8: #{tpu_custom_call.1} parent=1 // loop_exit
      _
    %1028 = vsyncpa [#allocation4], 1
    %s1029 = scalar_lea.sflag [#allocation4], 1
    %1030 = vsyncpa %s1029, 1
    %1031 = vsyncpa [#allocation7], 1
    %s1032 = scalar_lea.sflag [#allocation7], 1
    %1033 = vsyncpa %s1032, 1
    %1034 = vsyncpa [#allocation5], 1
    %s1035 = scalar_lea.sflag [#allocation5], 1
    %1036 = vsyncpa %s1035, 1

</llo_original>
